<compile_context>
chip_gen: v5e
topology: v5e:2x2
jax: 0.10.0
libtpu: 0.0.40
codegen_flags: <defaults>
</compile_context>

<pallas_src>
import jax
import jax.numpy as jnp
from jax.experimental import pallas as pl
from jax.experimental.pallas import tpu as pltpu


# --------------------------------------------------------------------------- helpers
def _round_up(x, m):
    return ((x + m - 1) // m) * m


def _choose_tile(dim, cap, align):
    """Pick (tile, padded_dim): tile is a multiple of `align`; tile divides padded_dim."""
    if dim <= cap:
        t = _round_up(dim, align)
        return t, t
    # Prefer an exact aligned divisor <= cap (no padding, no wasted compute).
    cand = (cap // align) * align
    while cand >= align:
        if dim % cand == 0:
            return cand, dim
        cand -= align
    # Awkward dim: use the cap and pad up to a multiple of it.
    # TODO(synk): replace wrapper-side padding with a pl.cdiv grid + masked edge blocks
    # to avoid the extra compute for dims like K=11008.
    t = (cap // align) * align
    return t, _round_up(dim, t)


def _detect_v7x():
    """v7x MXU has no integer mode (bf16/fp8 only) and 64 MiB VMEM per TensorCore."""
    try:
        kind = jax.devices()[0].device_kind.lower()
    except Exception:
        return False
    return ("v7" in kind) or ("7x" in kind)


# --------------------------------------------------------------------------- kernels
def _quant_kernel(x_ref, scalars_ref, xq_ref):
    # Upcast to f32 before round/clip so bf16 activations quantize identically to the
    # f32 reference.  jnp.round is round-half-to-even (matches __float2int_rn).
    x = x_ref[...].astype(jnp.float32)
    q = jnp.round(x * scalars_ref[1])                 # scalars_ref[1] = 1 / input_scale
    xq_ref[...] = jnp.clip(q, -128.0, 127.0).astype(jnp.int8)


def _make_mm_kernel(quantize_act, has_bias, int_mxu):
    """Tiled matmul with fused (scale * acc + bias) epilogue.

    quantize_act: activations arrive as float and are quantized per (tm, tk) tile.
    int_mxu:      int8 x int8 -> int32 MXU path (v5e/v6e); else bf16 x bf16 -> f32 (v7x).
    """

    def kernel(*refs):
        if has_bias:
            x_ref, w_ref, scalars_ref, bias_ref, o_ref, acc_ref = refs
        else:
            x_ref, w_ref, scalars_ref, o_ref, acc_ref = refs
            bias_ref = None

        k = pl.program_id(2)

        @pl.when(k == 0)
        def _():
            acc_ref[...] = jnp.zeros_like(acc_ref)

        if quantize_act:
            xf = x_ref[...].astype(jnp.float32)
            xq = jnp.clip(jnp.round(xf * scalars_ref[1]), -128.0, 127.0)
            lhs = xq.astype(jnp.int8) if int_mxu else xq.astype(jnp.bfloat16)
        else:
            lhs = x_ref[...] if int_mxu else x_ref[...].astype(jnp.bfloat16)

        if int_mxu:
            acc_ref[...] += jnp.dot(lhs, w_ref[...], preferred_element_type=jnp.int32)
        else:
            # TODO(synk): for v7x-heavy deployments pre-convert the weight to bf16/fp8
            # once in the wrapper instead of casting every (i, j, k) tile.
            acc_ref[...] += jnp.dot(lhs, w_ref[...].astype(jnp.bfloat16),
                                    preferred_element_type=jnp.float32)

        @pl.when(k == pl.num_programs(2) - 1)
        def _():
            out = acc_ref[...].astype(jnp.float32) * scalars_ref[0]  # input_scale*weight_scale
            if has_bias:
                out = out + bias_ref[...]
            o_ref[...] = out.astype(o_ref.dtype)

    return kernel


# --------------------------------------------------------------------------- wrapper
def static_w8a8_int8_linear(x, w_q, input_scale, weight_scale, bias=None, *,
                            tm_cap=None, tn_cap=1024, tk_cap=2048,
                            min_m_for_two_pass=1024):
    """x: [M, K] float, w_q: [K, N] int8, scales: scalar f32, bias: [N] float or None."""
    M, K = x.shape
    Kw, N = w_q.shape
    assert K == Kw
    out_dtype = x.dtype

    is_v7x = _detect_v7x()
    int_mxu = not is_v7x                               # v7x: no integer MXU path
    vmem_limit = (48 if is_v7x else 96) * 1024 * 1024  # 64 MiB vs 128 MiB physical VMEM

    if tm_cap is None:
        tm_cap = 512 if M >= 512 else 256              # prefill: halve weight re-streaming

    tm, M_pad = _choose_tile(M, tm_cap, 8)
    tn, N_pad = _choose_tile(N, tn_cap, 128)
    tk, K_pad = _choose_tile(K, tk_cap, 128)

    # v7x: 2 TensorCores/chip share the 'parallel' grid axes.  With a single i block,
    # keep >= 2 j blocks so both cores get work.
    if is_v7x and (M_pad // tm) == 1 and (N_pad // tn) == 1 and tn % 256 == 0:
        tn //= 2

    s_in = jnp.asarray(input_scale, jnp.float32).reshape(())
    s_w = jnp.asarray(weight_scale, jnp.float32).reshape(())
    # scalars[0] = combined epilogue scale, scalars[1] = 1 / input_scale (hoisted once).
    scalars = jnp.stack([s_in * s_w, 1.0 / s_in])

    has_bias = bias is not None

    # Zero-pad to tile multiples (zeros in K contribute nothing to the accumulation;
    # padded M/N rows/cols are sliced off at the end).
    xp = x if (M_pad == M and K_pad == K) else jnp.pad(x, ((0, M_pad - M), (0, K_pad - K)))
    wp = w_q if (K_pad == K and N_pad == N) else jnp.pad(w_q, ((0, K_pad - K), (0, N_pad - N)))
    if has_bias:
        b = jnp.asarray(bias, jnp.float32)
        bp = (b if N_pad == N else jnp.pad(b, (0, N_pad - N))).reshape(1, N_pad)

    grid = (M_pad // tm, N_pad // tn, K_pad // tk)

    # Prefill-sized M with multiple weight column-panels: quantize activations once so
    # the matmul re-reads them as int8 (4x less activation HBM traffic).  Otherwise fuse
    # the quantization into the matmul tile and skip the extra pallas_call entirely.
    two_pass = (M >= min_m_for_two_pass) and (grid[1] > 1)

    if two_pass:
        qm, qk = tm, tk  # reuse the matmul activation tile; both divide M_pad/K_pad
        lhs = pl.pallas_call(
            _quant_kernel,
            out_shape=jax.ShapeDtypeStruct((M_pad, K_pad), jnp.int8),
            grid_spec=pltpu.PrefetchScalarGridSpec(
                num_scalar_prefetch=0,
                grid=(M_pad // qm, K_pad // qk),
                in_specs=[
                    pl.BlockSpec((qm, qk), lambda i, j: (i, j)),
                    pl.BlockSpec(memory_space=pltpu.MemorySpace.SMEM),
                ],
                out_specs=pl.BlockSpec((qm, qk), lambda i, j: (i, j)),
            ),
            compiler_params=pltpu.CompilerParams(
                dimension_semantics=("parallel", "parallel"),
                vmem_limit_bytes=vmem_limit),
        )(xp, scalars)
    else:
        lhs = xp

    kernel = _make_mm_kernel(quantize_act=not two_pass, has_bias=has_bias, int_mxu=int_mxu)

    in_specs = [
        pl.BlockSpec((tm, tk), lambda i, j, k: (i, k)),       # activations (int8 or float)
        pl.BlockSpec((tk, tn), lambda i, j, k: (k, j)),       # int8 weights
        pl.BlockSpec(memory_space=pltpu.MemorySpace.SMEM),    # [out_scale, 1/input_scale]
    ]
    inputs = [lhs, wp, scalars]
    if has_bias:
        in_specs.append(pl.BlockSpec((1, tn), lambda i, j, k: (0, j)))
        inputs.append(bp)

    acc_dtype = jnp.int32 if int_mxu else jnp.float32

    out = pl.pallas_call(
        kernel,
        out_shape=jax.ShapeDtypeStruct((M_pad, N_pad), out_dtype),
        grid_spec=pltpu.PrefetchScalarGridSpec(
            num_scalar_prefetch=0,
            grid=grid,
            in_specs=in_specs,
            out_specs=pl.BlockSpec((tm, tn), lambda i, j, k: (i, j)),
            scratch_shapes=[pltpu.VMEM((tm, tn), acc_dtype)],
        ),
        compiler_params=pltpu.CompilerParams(
            dimension_semantics=("parallel", "parallel", "arbitrary"),
            vmem_limit_bytes=vmem_limit),
    )(*inputs)

    if M_pad != M or N_pad != N:
        out = out[:M, :N]
    return out


# --------------------------------------------------------------------------- reference
def _reference(x, w_q, input_scale, weight_scale, bias):
    x_q = jnp.clip(jnp.round(x.astype(jnp.float32) / input_scale), -128, 127).astype(jnp.int8)
    acc = jnp.dot(x_q.astype(jnp.int32), w_q.astype(jnp.int32))
    out = acc.astype(jnp.float32) * (input_scale * weight_scale)
    if bias is not None:
        out = out + bias.astype(jnp.float32)
    return out.astype(x.dtype)


if __name__ == "__main__":
    key = jax.random.PRNGKey(0)
    kx, kw, kb, kx2, kw2, kx3, kw3, kb3, kx4, kw4, kb4 = jax.random.split(key, 11)

    input_scale = jnp.float32(0.02)
    weight_scale = jnp.float32(0.01)

    # Case 1: small decode-ish shape, bias, fused-quantization path, single-block grid.
    M, K, N = 16, 256, 256
    x = jax.random.normal(kx, (M, K), dtype=jnp.float32)
    w_q = jax.random.randint(kw, (K, N), -128, 128, dtype=jnp.int32).astype(jnp.int8)
    bias = jax.random.normal(kb, (N,), dtype=jnp.float32)
    out = jax.block_until_ready(static_w8a8_int8_linear(x, w_q, input_scale, weight_scale, bias))
    ref = _reference(x, w_q, input_scale, weight_scale, bias)
    assert out.shape == (M, N) and out.dtype == x.dtype
    assert jnp.allclose(out, ref, atol=1e-4, rtol=1e-4), "mismatch vs reference (case 1)"

    # Case 2: no-bias variant, shrunk tile caps -> multi-step K accumulation, multi-block M/N.
    M2, K2, N2 = 64, 512, 256
    x2 = jax.random.normal(kx2, (M2, K2), dtype=jnp.float32)
    w_q2 = jax.random.randint(kw2, (K2, N2), -128, 128, dtype=jnp.int32).astype(jnp.int8)
    out2 = jax.block_until_ready(static_w8a8_int8_linear(
        x2, w_q2, input_scale, weight_scale, None, tm_cap=32, tn_cap=128, tk_cap=128))
    ref2 = _reference(x2, w_q2, input_scale, weight_scale, None)
    assert jnp.allclose(out2, ref2, atol=1e-4, rtol=1e-4), "mismatch vs reference (case 2)"

    # Case 3: force the two-pass (separate quant kernel) prefill path at a small shape.
    M3, K3, N3 = 64, 512, 512
    x3 = jax.random.normal(kx3, (M3, K3), dtype=jnp.float32)
    w_q3 = jax.random.randint(kw3, (K3, N3), -128, 128, dtype=jnp.int32).astype(jnp.int8)
    bias3 = jax.random.normal(kb3, (N3,), dtype=jnp.float32)
    out3 = jax.block_until_ready(static_w8a8_int8_linear(
        x3, w_q3, input_scale, weight_scale, bias3,
        tn_cap=128, tk_cap=128, min_m_for_two_pass=32))
    ref3 = _reference(x3, w_q3, input_scale, weight_scale, bias3)
    assert jnp.allclose(out3, ref3, atol=1e-4, rtol=1e-4), "mismatch vs reference (case 3)"

    # Case 4: non-divisible dims (padding path) with bf16 activations / bf16 output.
    M4, K4, N4 = 10, 320, 200
    x4 = jax.random.normal(kx4, (M4, K4), dtype=jnp.float32).astype(jnp.bfloat16)
    w_q4 = jax.random.randint(kw4, (K4, N4), -128, 128, dtype=jnp.int32).astype(jnp.int8)
    bias4 = jax.random.normal(kb4, (N4,), dtype=jnp.float32)
    out4 = jax.block_until_ready(static_w8a8_int8_linear(x4, w_q4, input_scale, weight_scale, bias4))
    ref4 = _reference(x4, w_q4, input_scale, weight_scale, bias4)
    assert out4.shape == (M4, N4) and out4.dtype == jnp.bfloat16
    assert jnp.allclose(out4.astype(jnp.float32), ref4.astype(jnp.float32),
                        atol=1e-2, rtol=1e-2), "mismatch vs reference (case 4)"

    print("KERNEL_OK")
</pallas_src>

<mosaic_0001>
module attributes {stable_mosaic.version = 11 : i64} {
  func.func @kernel(%arg0: i32, %arg1: i32, %arg2: i32, %arg3: memref<16x256xf32, #tpu.memory_space<vmem>>, %arg4: memref<256x256xi8, #tpu.memory_space<vmem>>, %arg5: memref<2xf32, #tpu.memory_space<smem>>, %arg6: memref<1x256xf32, #tpu.memory_space<vmem>>, %arg7: memref<16x256xf32, #tpu.memory_space<vmem>>, %arg8: memref<16x256xi32, #tpu.memory_space<vmem>>) attributes {dimension_semantics = [#tpu.dimension_semantics<parallel>, #tpu.dimension_semantics<parallel>, #tpu.dimension_semantics<arbitrary>], iteration_bounds = array<i64: 1, 1, 1>, scalar_prefetch = 0 : i64, scratch_operands = 1 : i64, tpu.core_type = #tpu.core_type<tc>, window_params = [{transform_indices = @transform_0, window_bounds = array<i64: 16, 256>}, {transform_indices = @transform_1, window_bounds = array<i64: 256, 256>}, {transform_indices = @transform_2, window_bounds = array<i64: 2>}, {transform_indices = @transform_3, window_bounds = array<i64: 1, 256>}, {transform_indices = @transform_4, window_bounds = array<i64: 16, 256>}]} {
    %c0_i32 = arith.constant 0 : i32
    %0 = arith.cmpi eq, %arg2, %c0_i32 : i32
    %1 = arith.extui %0 : i1 to i32
    %c0_i32_0 = arith.constant 0 : i32
    %2 = arith.cmpi ne, %1, %c0_i32_0 : i32
    scf.if %2 {
      %c0_i32_12 = arith.constant 0 : i32
      %21 = vector.broadcast %c0_i32_12 : i32 to vector<16x256xi32>
      %c0_13 = arith.constant 0 : index
      %c0_14 = arith.constant 0 : index
      %22 = vector.load %arg8[%c0_13, %c0_14] : memref<16x256xi32, #tpu.memory_space<vmem>>, vector<16x256xi32>
      tpu.vector_store %arg8[%c0_13, %c0_14], %21 {strides = array<i32>} : memref<16x256xi32, #tpu.memory_space<vmem>>, vector<16x256xi32>,
    } else {
    }
    %c0 = arith.constant 0 : index
    %c0_1 = arith.constant 0 : index
    %3 = vector.load %arg3[%c0, %c0_1] : memref<16x256xf32, #tpu.memory_space<vmem>>, vector<16x256xf32>
    %c1 = arith.constant 1 : index
    %4 = memref.load %arg5[%c1] : memref<2xf32, #tpu.memory_space<smem>>
    %5 = vector.broadcast %4 : f32 to vector<16x256xf32>
    %6 = arith.mulf %3, %5 : vector<16x256xf32>
    %7 = math.roundeven %6 : vector<16x256xf32>
    %cst = arith.constant -1.280000e+02 : f32
    %cst_2 = arith.constant 1.270000e+02 : f32
    %8 = vector.broadcast %cst : f32 to vector<16x256xf32>
    %9 = arith.maximumf %8, %7 : vector<16x256xf32>
    %10 = vector.broadcast %cst_2 : f32 to vector<16x256xf32>
    %11 = arith.minimumf %10, %9 : vector<16x256xf32>
    %12 = arith.fptosi %11 : vector<16x256xf32> to vector<16x256xi8>
    %c0_3 = arith.constant 0 : index
    %c0_4 = arith.constant 0 : index
    %13 = vector.load %arg8[%c0_3, %c0_4] : memref<16x256xi32, #tpu.memory_space<vmem>>, vector<16x256xi32>
    %c0_5 = arith.constant 0 : index
    %c0_6 = arith.constant 0 : index
    %14 = vector.load %arg4[%c0_5, %c0_6] : memref<256x256xi8, #tpu.memory_space<vmem>>, vector<256x256xi8>
    %cst_7 = arith.constant dense<0> : vector<16x256xi32>
    %15 = tpu.matmul %12, %14, %cst_7 {dimension_numbers = #tpu.dot_dimension_numbers<[1], [0], [0], [1], [0, 0, 1, 1], [], []>} : vector<16x256xi8>, vector<256x256xi8>, vector<16x256xi32> -> vector<16x256xi32>
    %16 = arith.addi %13, %15 : vector<16x256xi32>
    %c0_8 = arith.constant 0 : index
    %c0_9 = arith.constant 0 : index
    %17 = vector.load %arg8[%c0_8, %c0_9] : memref<16x256xi32, #tpu.memory_space<vmem>>, vector<16x256xi32>
    tpu.vector_store %arg8[%c0_8, %c0_9], %16 {strides = array<i32>} : memref<16x256xi32, #tpu.memory_space<vmem>>, vector<16x256xi32>,
    %c0_i32_10 = arith.constant 0 : i32
    %18 = arith.cmpi eq, %arg2, %c0_i32_10 : i32
    %19 = arith.extui %18 : i1 to i32
    %c0_i32_11 = arith.constant 0 : i32
    %20 = arith.cmpi ne, %19, %c0_i32_11 : i32
    scf.if %20 {
      %c0_12 = arith.constant 0 : index
      %c0_13 = arith.constant 0 : index
      %21 = vector.load %arg8[%c0_12, %c0_13] : memref<16x256xi32, #tpu.memory_space<vmem>>, vector<16x256xi32>
      %22 = arith.sitofp %21 : vector<16x256xi32> to vector<16x256xf32>
      %c0_14 = arith.constant 0 : index
      %23 = memref.load %arg5[%c0_14] : memref<2xf32, #tpu.memory_space<smem>>
      %24 = vector.broadcast %23 : f32 to vector<16x256xf32>
      %25 = arith.mulf %22, %24 : vector<16x256xf32>
      %c0_15 = arith.constant 0 : index
      %c0_16 = arith.constant 0 : index
      %26 = vector.load %arg6[%c0_15, %c0_16] : memref<1x256xf32, #tpu.memory_space<vmem>>, vector<1x256xf32>
      %27 = vector.broadcast %26 : vector<1x256xf32> to vector<16x256xf32>
      %28 = arith.addf %25, %27 : vector<16x256xf32>
      %c0_17 = arith.constant 0 : index
      %c0_18 = arith.constant 0 : index
      %29 = vector.load %arg7[%c0_17, %c0_18] : memref<16x256xf32, #tpu.memory_space<vmem>>, vector<16x256xf32>
      tpu.vector_store %arg7[%c0_17, %c0_18], %28 {strides = array<i32>} : memref<16x256xf32, #tpu.memory_space<vmem>>, vector<16x256xf32>,
    } else {
    }
    return
  }
  func.func @transform_0(%arg0: i32, %arg1: i32, %arg2: i32) -> (i32, i32) {
    %c0_i32 = arith.constant 0 : i32
    return %arg0, %arg2 : i32, i32
  }
  func.func @transform_1(%arg0: i32, %arg1: i32, %arg2: i32) -> (i32, i32) {
    %c0_i32 = arith.constant 0 : i32
    return %arg2, %arg1 : i32, i32
  }
  func.func @transform_2(%arg0: i32, %arg1: i32, %arg2: i32) -> i32 {
    %c0_i32 = arith.constant 0 : i32
    %c0_i32_0 = arith.constant 0 : i32
    return %c0_i32 : i32
  }
  func.func @transform_3(%arg0: i32, %arg1: i32, %arg2: i32) -> (i32, i32) {
    %c0_i32 = arith.constant 0 : i32
    %c0_i32_0 = arith.constant 0 : i32
    return %c0_i32, %arg1 : i32, i32
  }
  func.func @transform_4(%arg0: i32, %arg1: i32, %arg2: i32) -> (i32, i32) {
    %c0_i32 = arith.constant 0 : i32
    return %arg0, %arg1 : i32, i32
  }
}

</mosaic_0001>

<llo_original>
// kernel: tpu_custom_call.1
$region0: #{tpu_custom_call.1}
  #allocation0 [shape = 'u32[]', space=smem, size = 0x4, offset = 0x4, fixed_abs, tag = 'smem constant byte address 0x4 - core index']
  #allocation1 [shape = 'u32[72,128]{1,0:T(1,128)}', space=vmem, size = 0x9000, scoped, tag = 'internal scratch']
  #allocation2 [shape = 's32[16,256]{1,0:T(8,128)}', space=vmem, size = 0x4000, scoped, tag = 'scratch operand']
  %s0 = inlined_call_operand.hbm [shape: f32[16,256], index: 0, kind: input, shape index: {}]
  %s1 = inlined_call_operand.hbm [shape: s8[256,256], index: 1, kind: input, shape index: {}]
  %s2 = inlined_call_operand.hbm [shape: f32[2], index: 2, kind: input, shape index: {}]
  %s3 = inlined_call_operand.vmem [shape: f32[1,256], index: 3, kind: input, shape index: {}]
  %s4 = inlined_call_operand.hbm [shape: f32[16,256], index: 4, kind: output, shape index: {}]
  %s5 = sld [smem:[#allocation0]]
  $region46: #{tpu_custom_call.1} parent=0
    _
  %s7 = ssub.s32 1, %s5
  %s8 = scalar_select 0, %s7, %s5
  $region1: #{tpu_custom_call.1} parent=0
    #allocation3 [shape = 'u8[16384]{0}', space=vmem, size = 0x4000, scoped, tag = 'input window, operand 0, single buffered']
    #allocation4 [shape = 's32[1]{0}', space=sflag, size = 0x4, scoped, tag = 'scoped memory for tpu_custom_call.1']
    #allocation5 [shape = 's32[1]{0}', space=sflag, size = 0x4, scoped, tag = 'scoped memory for tpu_custom_call.1']
    #allocation6 [shape = 's32[1]{0}', space=sflag, size = 0x4, scoped, tag = 'scoped memory for tpu_custom_call.1']
    #allocation7 [shape = 'u8[65536]{0}', space=vmem, size = 0x10000, scoped, tag = 'input window, operand 1, single buffered']
    #allocation8 [shape = 's32[1]{0}', space=sflag, size = 0x4, scoped, tag = 'scoped memory for tpu_custom_call.1']
    #allocation9 [shape = 'u8[512]{0}', space=smem, size = 0x200, scoped, tag = 'input window, operand 2, single buffered']
    #allocation10 [shape = 'u8[16384]{0}', space=vmem, size = 0x4000, scoped, tag = 'output window, operand 0, single buffered']
    %9 = vsyncpa [#allocation4], 0
    %10 = vsyncpa [#allocation8], 0
    %11 = vsyncpa [#allocation6], 0
    %12 = vsyncpa [#allocation5], 0
    // Predicated region
    $region2: #{tpu_custom_call.1} parent=1 // pred_check
      _
    $region3: #{tpu_custom_call.1} parent=1 // pred_check_branch
      %14 = sbr.rel (0) target = $region5
    $region4: #{tpu_custom_call.1} parent=1 // pred_region
      %16 = vsyncadd [#allocation4], 0
      %s17 = sshll.u32 %s0, 4
      %s18 = int_to_ptr.hbm [resolvable:$true] %s17
      %s19 = sshll.u32 [#allocation3], 4
      %s20 = int_to_ptr.vmem [resolvable:$true] %s19
      %25 = dma.hbm_to_vmem [thread:$0]  %s18, 512, %s20, [#allocation4], 256, 256, 16
    $region5: #{tpu_custom_call.1} parent=1 // pred_fallthru
      _
    // Predicated region
    $region6: #{tpu_custom_call.1} parent=1 // pred_check
      _
    $region7: #{tpu_custom_call.1} parent=1 // pred_check_branch
      %27 = sbr.rel (0) target = $region9
    $region8: #{tpu_custom_call.1} parent=1 // pred_region
      %29 = vsyncadd [#allocation8], 0
      %s30 = sshll.u32 %s1, 4
      %s31 = int_to_ptr.hbm [resolvable:$true] %s30
      %s32 = sshll.u32 [#allocation7], 4
      %s33 = int_to_ptr.vmem [resolvable:$true] %s32
      %38 = dma.hbm_to_vmem [thread:$0]  %s31, 2048, %s33, [#allocation8], 256, 256, 16
    $region9: #{tpu_custom_call.1} parent=1 // pred_fallthru
      _
    // Predicated region
    $region10: #{tpu_custom_call.1} parent=1 // pred_check
      _
    $region11: #{tpu_custom_call.1} parent=1 // pred_check_branch
      %40 = sbr.rel (0) target = $region13
    $region12: #{tpu_custom_call.1} parent=1 // pred_region
      %42 = vsyncadd [#allocation6], 0
      %s44 = sshll.u32 %s2, 4
      %s45 = int_to_ptr.hbm [resolvable:$true] %s44
      %47 = dma.hbm_to_smem %s45, 16, [#allocation9], [#allocation6]
    $region13: #{tpu_custom_call.1} parent=1 // pred_fallthru
      _
    // Predicated region
    $region14: #{tpu_custom_call.1} parent=1 // pred_check
      _
    $region15: #{tpu_custom_call.1} parent=1 // pred_check_branch
      %49 = sbr.rel (0) target = $region17
    $region16: #{tpu_custom_call.1} parent=1 // pred_region
      _
    $region17: #{tpu_custom_call.1} parent=1 // pred_fallthru
      _
    // Predicated region
    $region18: #{tpu_custom_call.1} parent=1 // pred_check
      _
    $region19: #{tpu_custom_call.1} parent=1 // pred_check_branch
      %51 = sbr.rel (0) target = $region21
    $region20: #{tpu_custom_call.1} parent=1 // pred_region
      %53 = dma.done [#allocation4], 512
    $region21: #{tpu_custom_call.1} parent=1 // pred_fallthru
      _
    // Predicated region
    $region22: #{tpu_custom_call.1} parent=1 // pred_check
      _
    $region23: #{tpu_custom_call.1} parent=1 // pred_check_branch
      %55 = sbr.rel (0) target = $region25
    $region24: #{tpu_custom_call.1} parent=1 // pred_region
      %57 = dma.done [#allocation8], 2048
    $region25: #{tpu_custom_call.1} parent=1 // pred_fallthru
      _
    // Predicated region
    $region26: #{tpu_custom_call.1} parent=1 // pred_check
      _
    $region27: #{tpu_custom_call.1} parent=1 // pred_check_branch
      %59 = sbr.rel (0) target = $region29
    $region28: #{tpu_custom_call.1} parent=1 // pred_region
      %61 = dma.done [#allocation6], 16
    $region29: #{tpu_custom_call.1} parent=1 // pred_fallthru
      _
    %62 = sfence
    %p63 = scmp.eq.s32.totalorder 0, 0
    // Predicated region
    $region30: #{tpu_custom_call.1} parent=1 // pred_check
      %p64 = pneg %p63
    $region31: #{tpu_custom_call.1} parent=1 // pred_check_branch
      %66 = sbr.rel (%p64) target = $region33
    $region32: #{tpu_custom_call.1} parent=1 // pred_region
      %67 = vst [vmem:[#allocation2] sm:$0xff] 0
      %68 = vst [vmem:[#allocation2 + $0x8] sm:$0xff] 0
      %69 = vst [vmem:[#allocation2 + $0x10] sm:$0xff] 0
      %70 = vst [vmem:[#allocation2 + $0x18] sm:$0xff] 0
    $region33: #{tpu_custom_call.1} parent=1 // pred_fallthru
      _
    %v71 = vld [vmem:[#allocation3] sm:$0xff]
    %v72 = vld [vmem:[#allocation3 + $0x8] sm:$0xff]
    %v73 = vld [vmem:[#allocation3 + $0x10] sm:$0xff]
    %v74 = vld [vmem:[#allocation3 + $0x18] sm:$0xff]
    %s75 = sld [smem:[#allocation9 + $0x1]]
    %v76 = vstv %s75
    %v77 = vmul.f32 %v71, %v76
    %v78 = vmul.f32 %v72, %v76
    %v79 = vmul.f32 %v73, %v76
    %v80 = vmul.f32 %v74, %v76
    %v81 = vround.ne.pseudo %v77
    %v82 = vround.ne.pseudo %v78
    %v83 = vround.ne.pseudo %v79
    %v84 = vround.ne.pseudo %v80
    %v85 = vmax.f32 %v81, -128.0
    %v86 = vmax.f32 %v82, -128.0
    %v87 = vmax.f32 %v83, -128.0
    %v88 = vmax.f32 %v84, -128.0
    %v89 = vmin.f32 %v85, 127.0
    %v90 = vmin.f32 %v86, 127.0
    %v91 = vmin.f32 %v87, 127.0
    %v92 = vmin.f32 %v88, 127.0
    %v93 = vmax.f32 %v89, -128.0
    %v94 = vmax.f32 %v90, -128.0
    %v95 = vmax.f32 %v91, -128.0
    %v96 = vmax.f32 %v92, -128.0
    %v97 = vmin.f32 %v93, 127.0
    %v98 = vmin.f32 %v94, 127.0
    %v99 = vmin.f32 %v95, 127.0
    %v100 = vmin.f32 %v96, 127.0
    %v101 = vcvt.f32.s32.to.zero.pseudo %v97
    %v102 = vcvt.f32.s32.to.zero.pseudo %v98
    %v103 = vcvt.f32.s32.to.zero.pseudo %v99
    %v104 = vcvt.f32.s32.to.zero.pseudo %v100
    %v105 = vpack.c.b16 %v103, %v101
    %v106 = vpack.c.b8 %v105, %v105
    %v107 = vpack.c.b16 %v104, %v102
    %v108 = vpack.c.b8 %v107, %v107
    %v109 = vld [vmem:[#allocation2] sm:$0xff]
    %v110 = vld [vmem:[#allocation2 + $0x8] sm:$0xff]
    %v111 = vld [vmem:[#allocation2 + $0x10] sm:$0xff]
    %v112 = vld [vmem:[#allocation2 + $0x18] sm:$0xff]
    %v113 = vld [vmem:[#allocation7] sm:$0xff]
    %v114 = vld [vmem:[#allocation7 + $0x8] sm:$0xff]
    %v115 = vld [vmem:[#allocation7 + $0x10] sm:$0xff]
    %v116 = vld [vmem:[#allocation7 + $0x18] sm:$0xff]
    %v117 = vld [vmem:[#allocation7 + $0x20] sm:$0xff]
    %v118 = vld [vmem:[#allocation7 + $0x28] sm:$0xff]
    %v119 = vld [vmem:[#allocation7 + $0x30] sm:$0xff]
    %v120 = vld [vmem:[#allocation7 + $0x38] sm:$0xff]
    %v121 = vld [vmem:[#allocation7 + $0x40] sm:$0xff]
    %v122 = vld [vmem:[#allocation7 + $0x48] sm:$0xff]
    %v123 = vld [vmem:[#allocation7 + $0x50] sm:$0xff]
    %v124 = vld [vmem:[#allocation7 + $0x58] sm:$0xff]
    %v125 = vld [vmem:[#allocation7 + $0x60] sm:$0xff]
    %v126 = vld [vmem:[#allocation7 + $0x68] sm:$0xff]
    %v127 = vld [vmem:[#allocation7 + $0x70] sm:$0xff]
    %v128 = vld [vmem:[#allocation7 + $0x78] sm:$0xff]
    %129 = vmatpush.s8.msra.mxu0 %v119
    %130 = vmatpush.s8.msra.mxu0 %v117
    %131 = vmatpush.s8.msra.mxu0 %v115
    %132 = vmatpush.s8.msra.mxu0 %v113
    %133 = vmatmul.s8.gmra.mxu0 %v106
    %v134 = vpop.s32.mrf.mxu0
    %v135 = vadd.s32 0, %v134
    %v136 = vpop.s32.mrf.mxu0
    %v137 = vadd.s32 0, %v136
    %v138 = vpop.s32.mrf.mxu0
    %v139 = vpop.s32.mrf.mxu0
    %140 = vdwg.mxu0
    %141 = vmatpush.s8.msra.mxu0 %v127
    %142 = vmatpush.s8.msra.mxu0 %v125
    %143 = vmatpush.s8.msra.mxu0 %v123
    %144 = vmatpush.s8.msra.mxu0 %v121
    %145 = vmatmul.s8.gmra.mxu0 %v108
    %v146 = vpop.s32.mrf.mxu0
    %v147 = vadd.s32 %v135, %v146
    %v148 = vpop.s32.mrf.mxu0
    %v149 = vadd.s32 %v137, %v148
    %v150 = vpop.s32.mrf.mxu0
    %v151 = vpop.s32.mrf.mxu0
    %152 = vdwg.mxu0
    %153 = vmatpush.s8.msra.mxu0 %v120
    %154 = vmatpush.s8.msra.mxu0 %v118
    %155 = vmatpush.s8.msra.mxu0 %v116
    %156 = vmatpush.s8.msra.mxu0 %v114
    %157 = vmatmul.s8.gmra.mxu0 %v106
    %v158 = vpop.s32.mrf.mxu0
    %v159 = vadd.s32 0, %v158
    %v160 = vpop.s32.mrf.mxu0
    %v161 = vadd.s32 0, %v160
    %v162 = vpop.s32.mrf.mxu0
    %v163 = vpop.s32.mrf.mxu0
    %164 = vdwg.mxu0
    %165 = vmatpush.s8.msra.mxu0 %v128
    %166 = vmatpush.s8.msra.mxu0 %v126
    %167 = vmatpush.s8.msra.mxu0 %v124
    %168 = vmatpush.s8.msra.mxu0 %v122
    %169 = vmatmul.s8.gmra.mxu0 %v108
    %v170 = vpop.s32.mrf.mxu0
    %v171 = vadd.s32 %v159, %v170
    %v172 = vpop.s32.mrf.mxu0
    %v173 = vadd.s32 %v161, %v172
    %v174 = vpop.s32.mrf.mxu0
    %v175 = vpop.s32.mrf.mxu0
    %176 = vdwg.mxu0
    %v177 = vadd.s32 %v109, %v147
    %v178 = vadd.s32 %v110, %v171
    %v179 = vadd.s32 %v111, %v149
    %v180 = vadd.s32 %v112, %v173
    %181 = vst [vmem:[#allocation2] sm:$0xff] %v177
    %182 = vst [vmem:[#allocation2 + $0x8] sm:$0xff] %v178
    %183 = vst [vmem:[#allocation2 + $0x10] sm:$0xff] %v179
    %184 = vst [vmem:[#allocation2 + $0x18] sm:$0xff] %v180
    // Predicated region
    $region34: #{tpu_custom_call.1} parent=1 // pred_check
      %p185 = pneg %p63
    $region35: #{tpu_custom_call.1} parent=1 // pred_check_branch
      %187 = sbr.rel (%p185) target = $region37
    $region36: #{tpu_custom_call.1} parent=1 // pred_region
      %v188 = vld [vmem:[#allocation2] sm:$0xff]
      %v189 = vld [vmem:[#allocation2 + $0x8] sm:$0xff]
      %v190 = vld [vmem:[#allocation2 + $0x10] sm:$0xff]
      %v191 = vld [vmem:[#allocation2 + $0x18] sm:$0xff]
      %v192 = vcvt.s32.f32 %v188
      %v193 = vcvt.s32.f32 %v189
      %v194 = vcvt.s32.f32 %v190
      %v195 = vcvt.s32.f32 %v191
      %s196 = sld [smem:[#allocation9]]
      %v197 = vstv %s196
      %v198 = vmul.f32 %v192, %v197
      %v199 = vmul.f32 %v193, %v197
      %v200 = vmul.f32 %v194, %v197
      %v201 = vmul.f32 %v195, %v197
      %v202 = vld [vmem:[%s3] sm:$0x3]
      %v204 = vperm.slane %v202, 0
      %v205 = vperm.slane %v202, 1
      %v208 = vadd.f32 %v198, %v204
      %v209 = vadd.f32 %v199, %v205
      %v210 = vadd.f32 %v200, %v204
      %v211 = vadd.f32 %v201, %v205
      %212 = vst [vmem:[#allocation10] sm:$0xff] %v208
      %213 = vst [vmem:[#allocation10 + $0x8] sm:$0xff] %v209
      %214 = vst [vmem:[#allocation10 + $0x10] sm:$0xff] %v210
      %215 = vst [vmem:[#allocation10 + $0x18] sm:$0xff] %v211
    $region37: #{tpu_custom_call.1} parent=1 // pred_fallthru
      _
    // Predicated region
    $region38: #{tpu_custom_call.1} parent=1 // pred_check
      _
    $region39: #{tpu_custom_call.1} parent=1 // pred_check_branch
      %217 = sbr.rel (0) target = $region41
    $region40: #{tpu_custom_call.1} parent=1 // pred_region
      %219 = vsyncadd [#allocation5], 0
      %s220 = sshll.u32 [#allocation10], 4
      %s221 = int_to_ptr.vmem [resolvable:$true] %s220
      %s222 = sshll.u32 %s4, 4
      %s223 = int_to_ptr.hbm [resolvable:$true] %s222
      %228 = dma.vmem_to_hbm [thread:$0]  %s221, 512, %s223, [#allocation5], 256, 256, 16
    $region41: #{tpu_custom_call.1} parent=1 // pred_fallthru
      _
    // Predicated region
    $region42: #{tpu_custom_call.1} parent=1 // pred_check
      _
    $region43: #{tpu_custom_call.1} parent=1 // pred_check_branch
      %230 = sbr.rel (0) target = $region45
    $region44: #{tpu_custom_call.1} parent=1 // pred_region
      %232 = dma.done [#allocation5], 512
    $region45: #{tpu_custom_call.1} parent=1 // pred_fallthru
      _
    %233 = vsyncpa [#allocation4], 1
    %234 = vsyncpa [#allocation8], 1
    %235 = vsyncpa [#allocation5], 1
    %236 = vsyncpa [#allocation6], 1

</llo_original>
